<compile_context>
chip_gen: v6e
topology: v6e:2x2x1
jax: 0.10.0
libtpu: 0.0.40
codegen_flags: <defaults>
</compile_context>

<pallas_src>
import functools

import jax
import jax.numpy as jnp
from jax import lax
from jax.experimental import pallas as pl
from jax.experimental.pallas import tpu as pltpu

MIN_STD = 1e-4  # stand-in for G.min_std (config constant)


def _round_up(a: int, m: int) -> int:
    return ((a + m - 1) // m) * m


def _softplus(v):
    # Stable softplus; matches F.softplus within fp32 rounding.
    # exp / log1p run on the EUP slot, essentially free next to MXU/HBM work.
    return jnp.maximum(v, 0.0) + jnp.log1p(jnp.exp(-jnp.abs(v)))


# ---------------------------------------------------------------------------
# Path A: full weight resident in VMEM (DMA'd once); grid over batch tiles.
# ---------------------------------------------------------------------------
def _gausshead_kernel(z, x_ref, w_ref, b_ref, out_ref):
    # x_ref  : (bb, d_in)      VMEM
    # w_ref  : (d_in, 2z)      VMEM (grid-invariant -> stays resident)
    # b_ref  : (1, 2z)         VMEM
    # out_ref: (bb, 2z)        fused [mu | std] block (lane-dense store)
    y = jnp.dot(x_ref[...], w_ref[...], preferred_element_type=jnp.float32)
    y = y + b_ref[...]
    lane = lax.broadcasted_iota(jnp.int32, y.shape, 1)
    sp = _softplus(y) + MIN_STD          # all lanes; EUP slot has slack here
    out = jnp.where(lane < z, y, sp)     # mu lanes keep y, std lanes -> softplus
    out_ref[...] = out.astype(out_ref.dtype)


# ---------------------------------------------------------------------------
# Path B: K-split for weights too large to hold resident (v7x / huge heads).
# Reduction axis is the last grid axis ("arbitrary"); f32 VMEM accumulator.
# ---------------------------------------------------------------------------
def _gausshead_ksplit_kernel(z, d_in, tk, ragged_k,
                             x_ref, w_ref, b_ref, out_ref, acc_ref):
    k = pl.program_id(1)

    @pl.when(k == 0)
    def _init():
        acc_ref[...] = jnp.zeros_like(acc_ref)

    x = x_ref[...]
    w = w_ref[...]
    if ragged_k:
        # Partial last K block: Pallas does NOT zero-fill the out-of-bounds
        # region, so mask both operands (avoids 0 * garbage -> NaN).
        rem = d_in - k * tk
        x = jnp.where(lax.broadcasted_iota(jnp.int32, x.shape, 1) < rem, x, 0)
        w = jnp.where(lax.broadcasted_iota(jnp.int32, w.shape, 0) < rem, w, 0)
    acc_ref[...] += jnp.dot(x, w, preferred_element_type=jnp.float32)

    @pl.when(k == pl.num_programs(1) - 1)
    def _finalize():
        y = acc_ref[...] + b_ref[...]
        lane = lax.broadcasted_iota(jnp.int32, y.shape, 1)
        out = jnp.where(lane < z, y, _softplus(y) + MIN_STD)
        out_ref[...] = out.astype(out_ref.dtype)


@functools.partial(jax.jit,
                   static_argnames=("block_b", "block_k", "compute_dtype"))
def gauss_head(x, w, b, past_z=None, *, block_b=512, block_k=None,
               compute_dtype=None):
    """Pallas implementation of GaussHead.forward.

    Args:
      x:      (B, input_size)
      w:      (input_size, 2*z_size)   (transposed vs. torch Linear.weight)
      b:      (2*z_size,)
      past_z: (B, z_size) or None
      block_b: batch tile upper bound.
      block_k: reduction tile; if set (and < input_size) forces the K-split
               path.  Auto-enabled when weights would not fit the VMEM budget.
      compute_dtype: e.g. jnp.bfloat16 to halve x/w HBM traffic (f32 accum).
    Returns:
      mu:  (B, z_size)
      std: (B, z_size) -- diagonal of the MultivariateNormal covariance.
    """
    B, d_in = x.shape
    two_z = w.shape[1]
    if two_z % 2 != 0:
        raise ValueError(f"w.shape[1]={two_z} must be even ([mu | log_std])")
    if w.shape[0] != d_in or b.shape != (two_z,):
        raise ValueError("inconsistent GaussHead parameter shapes")
    z = two_z // 2

    if compute_dtype is not None:
        x = x.astype(compute_dtype)
        w = w.astype(compute_dtype)
    in_item = jnp.dtype(x.dtype).itemsize
    sublane = {4: 8, 2: 16, 1: 32}.get(in_item, 8)   # packing-aligned batch tile
    b2 = b.astype(jnp.float32).reshape(1, two_z)

    # ---- generation-aware VMEM budget (~96 MiB v5e/v6e, ~48 MiB v7x) ----
    try:
        phys_vmem = int(pltpu.get_tpu_info().vmem_capacity_bytes)
    except Exception:  # pragma: no cover - conservative fallback
        phys_vmem = 64 * 1024 * 1024
    vmem_cap = (phys_vmem * 3) // 4

    # ---- batch tile: large (amortize ~0.35us/step), but >=2 grid steps when
    #      possible so ("parallel",) shards across v7x's two TensorCores. ----
    if B <= sublane:
        bb = B                                    # single (full-dim) tile
    else:
        bb = min(_round_up(block_b, sublane),
                 _round_up(pl.cdiv(B, 2), sublane))

    def _resident_bytes(bbv):
        return (2 * bbv * d_in * in_item          # x tiles, double buffered
                + 2 * d_in * two_z * in_item      # weights (allocated 2x, DMA'd once)
                + 2 * two_z * 4                   # bias
                + 2 * bbv * two_z * 4)            # fused output tiles

    # ---- resident-weight path vs. K-split path ----
    use_ksplit = block_k is not None and block_k < d_in
    if block_k is None and 2 * d_in * two_z * in_item > vmem_cap // 2:
        block_k = 512
        use_ksplit = block_k < d_in
    if use_ksplit:
        block_k = _round_up(block_k, 128)         # lane-dim constraint on x block
        use_ksplit = block_k < d_in

    if not use_ksplit:
        while bb > sublane and _resident_bytes(bb) > vmem_cap:
            bb = max(sublane, _round_up(bb // 2, sublane))

        grid = (pl.cdiv(B, bb),)
        kernel = functools.partial(_gausshead_kernel, z)
        in_specs = [
            pl.BlockSpec((bb, d_in), lambda i: (i, 0)),      # x tile
            pl.BlockSpec((d_in, two_z), lambda i: (0, 0)),   # fused weight (resident)
            pl.BlockSpec((1, two_z), lambda i: (0, 0)),      # fused bias
        ]
        out_specs = pl.BlockSpec((bb, two_z), lambda i: (i, 0))
        scratch_shapes = []
        dim_sem = ("parallel",)
        vmem_est = _resident_bytes(bb)
    else:
        nk = pl.cdiv(d_in, block_k)
        ragged_k = (d_in % block_k) != 0
        grid = (pl.cdiv(B, bb), nk)
        kernel = functools.partial(_gausshead_ksplit_kernel, z, d_in, block_k,
                                   ragged_k)
        in_specs = [
            pl.BlockSpec((bb, block_k), lambda i, k: (i, k)),     # x tile
            pl.BlockSpec((block_k, two_z), lambda i, k: (k, 0)),  # weight K-slab
            pl.BlockSpec((1, two_z), lambda i, k: (0, 0)),        # fused bias
        ]
        out_specs = pl.BlockSpec((bb, two_z), lambda i, k: (i, 0))
        scratch_shapes = [pltpu.VMEM((bb, two_z), jnp.float32)]
        dim_sem = ("parallel", "arbitrary")
        vmem_est = (2 * bb * block_k * in_item + 2 * block_k * two_z * in_item
                    + 2 * two_z * 4 + 2 * bb * two_z * 4 + bb * two_z * 4)

    cost = pl.CostEstimate(
        flops=2 * B * d_in * two_z,
        transcendentals=2 * B * two_z,
        bytes_accessed=(B * d_in + d_in * two_z) * in_item + 4 * (two_z + B * two_z),
    )
    vmem_limit = int(min(max(2 * vmem_est, 32 * 1024 * 1024), vmem_cap))

    out = pl.pallas_call(
        kernel,
        out_shape=jax.ShapeDtypeStruct((B, two_z), jnp.float32),
        grid_spec=pltpu.PrefetchScalarGridSpec(
            num_scalar_prefetch=0,
            grid=grid,
            in_specs=in_specs,
            out_specs=out_specs,
            scratch_shapes=scratch_shapes,
        ),
        compiler_params=pltpu.CompilerParams(
            dimension_semantics=dim_sem,
            vmem_limit_bytes=vmem_limit,
        ),
        cost_estimate=cost,
    )(x, w, b2)

    # mu/std split (and past_z add) fuse into one XLA slice-fusion per output;
    # inside a larger jit the slices fuse directly into the consumers.
    mu = out[:, :z]
    std = out[:, z:]
    if past_z is not None:
        mu = mu + past_z.astype(mu.dtype)
    return mu, std


def init_params(key, input_size, z_size):
    """Deterministic nn.Linear-style init: U(-1/sqrt(fan_in), 1/sqrt(fan_in))."""
    kw, kb = jax.random.split(key)
    bound = 1.0 / jnp.sqrt(jnp.float32(input_size))
    w = jax.random.uniform(kw, (input_size, 2 * z_size), jnp.float32, -bound, bound)
    b = jax.random.uniform(kb, (2 * z_size,), jnp.float32, -bound, bound)
    return w, b


if __name__ == "__main__":
    key = jax.random.PRNGKey(0)
    k_x, k_p, k_z, k_x2, k_x4, k_p4, k_x5, k_p5 = jax.random.split(key, 8)

    B, input_size, z_size = 16, 32, 16
    x = jax.random.normal(k_x, (B, input_size), jnp.float32)
    past_z = jax.random.normal(k_z, (B, z_size), jnp.float32)
    w, b = init_params(k_p, input_size, z_size)

    def ref(xv, wv, bv, pz):
        y = xv @ wv + bv
        zz = wv.shape[1] // 2
        m = y[:, :zz] + (pz if pz is not None else 0.0)
        s = jax.nn.softplus(y[:, zz:]) + MIN_STD
        return m, s

    # Case 1: past_z provided (resident-weight path, 2 grid steps).
    mu, std = gauss_head(x, w, b, past_z)
    jax.block_until_ready((mu, std))
    mu_r, std_r = ref(x, w, b, past_z)
    assert mu.shape == (B, z_size) and std.shape == (B, z_size)
    assert jnp.allclose(mu, mu_r, atol=1e-5, rtol=1e-5)
    assert jnp.allclose(std, std_r, atol=1e-5, rtol=1e-5)

    # Case 2: past_z=None.
    mu0, std0 = gauss_head(x, w, b, None)
    jax.block_until_ready((mu0, std0))
    mu0_r, std0_r = ref(x, w, b, None)
    assert jnp.allclose(mu0, mu0_r, atol=1e-5, rtol=1e-5)
    assert jnp.allclose(std0, std0_r, atol=1e-5, rtol=1e-5)

    # Case 3: ragged batch (no wrapper pad; last tile masked by Pallas).
    B3 = 13
    x3 = jax.random.normal(k_x2, (B3, input_size), jnp.float32)
    mu3, std3 = gauss_head(x3, w, b, None)
    jax.block_until_ready((mu3, std3))
    mu3_r, std3_r = ref(x3, w, b, None)
    assert mu3.shape == (B3, z_size) and std3.shape == (B3, z_size)
    assert jnp.allclose(mu3, mu3_r, atol=1e-5, rtol=1e-5)
    assert jnp.allclose(std3, std3_r, atol=1e-5, rtol=1e-5)

    # Case 4: forced K-split path, ragged reduction dim (320 % 128 != 0).
    B4, d4 = 24, 320
    x4 = jax.random.normal(k_x4, (B4, d4), jnp.float32)
    w4, b4 = init_params(k_p4, d4, z_size)
    mu4, std4 = gauss_head(x4, w4, b4, None, block_k=128)
    jax.block_until_ready((mu4, std4))
    mu4_r, std4_r = ref(x4, w4, b4, None)
    assert jnp.allclose(mu4, mu4_r, atol=2e-3, rtol=2e-3)
    assert jnp.allclose(std4, std4_r, atol=2e-3, rtol=2e-3)

    # Case 5: forced K-split path, evenly dividing reduction dim.
    B5, d5 = 24, 256
    x5 = jax.random.normal(k_x5, (B5, d5), jnp.float32)
    w5, b5 = init_params(k_p5, d5, z_size)
    mu5, std5 = gauss_head(x5, w5, b5, None, block_k=128)
    jax.block_until_ready((mu5, std5))
    mu5_r, std5_r = ref(x5, w5, b5, None)
    assert jnp.allclose(mu5, mu5_r, atol=2e-3, rtol=2e-3)
    assert jnp.allclose(std5, std5_r, atol=2e-3, rtol=2e-3)

    # Case 6: bf16 compute path (f32 accumulation), looser tolerance.
    mu6, std6 = gauss_head(x, w, b, past_z, compute_dtype=jnp.bfloat16)
    jax.block_until_ready((mu6, std6))
    assert jnp.allclose(mu6, mu_r, atol=5e-2, rtol=5e-2)
    assert jnp.allclose(std6, std_r, atol=5e-2, rtol=5e-2)

    print("KERNEL_OK")
</pallas_src>

<mosaic_0001>
module attributes {stable_mosaic.version = 11 : i64} {
  func.func @_gausshead_kernel(%arg0: i32, %arg1: memref<8x32xf32, #tpu.memory_space<vmem>>, %arg2: memref<32x32xf32, #tpu.memory_space<vmem>>, %arg3: memref<1x32xf32, #tpu.memory_space<vmem>>, %arg4: memref<8x32xf32, #tpu.memory_space<vmem>>) attributes {dimension_semantics = [#tpu.dimension_semantics<parallel>], iteration_bounds = array<i64: 2>, scalar_prefetch = 0 : i64, scratch_operands = 0 : i64, tpu.core_type = #tpu.core_type<tc>, window_params = [{transform_indices = @transform_0, window_bounds = array<i64: 8, 32>}, {pipeline_mode = #tpu.pipeline_mode<synchronous>, transform_indices = @transform_1, window_bounds = array<i64: 32, 32>}, {pipeline_mode = #tpu.pipeline_mode<synchronous>, transform_indices = @transform_2, window_bounds = array<i64: 1, 32>}, {transform_indices = @transform_3, window_bounds = array<i64: 8, 32>}]} {
    %c0 = arith.constant 0 : index
    %c0_0 = arith.constant 0 : index
    %0 = vector.load %arg1[%c0, %c0_0] : memref<8x32xf32, #tpu.memory_space<vmem>>, vector<8x32xf32>
    %c0_1 = arith.constant 0 : index
    %c0_2 = arith.constant 0 : index
    %1 = vector.load %arg2[%c0_1, %c0_2] : memref<32x32xf32, #tpu.memory_space<vmem>>, vector<32x32xf32>
    %cst = arith.constant dense<0.000000e+00> : vector<8x32xf32>
    %2 = tpu.matmul %0, %1, %cst {dimension_numbers = #tpu.dot_dimension_numbers<[1], [0], [0], [1], [0, 0, 1, 1], [], []>} : vector<8x32xf32>, vector<32x32xf32>, vector<8x32xf32> -> vector<8x32xf32>
    %c0_3 = arith.constant 0 : index
    %c0_4 = arith.constant 0 : index
    %3 = vector.load %arg3[%c0_3, %c0_4] : memref<1x32xf32, #tpu.memory_space<vmem>>, vector<1x32xf32>
    %4 = vector.broadcast %3 : vector<1x32xf32> to vector<8x32xf32>
    %5 = arith.addf %2, %4 : vector<8x32xf32>
    %6 = tpu.iota {dimensions = array<i32: 1>} : vector<8x32xi32>
    %cst_5 = arith.constant 0.000000e+00 : f32
    %7 = vector.broadcast %cst_5 : f32 to vector<8x32xf32>
    %8 = arith.maximumf %5, %7 : vector<8x32xf32>
    %9 = math.absf %5 : vector<8x32xf32>
    %cst_6 = arith.constant 0.000000e+00 : f32
    %10 = vector.broadcast %cst_6 : f32 to vector<8x32xf32>
    %11 = arith.subf %10, %9 : vector<8x32xf32>
    %12 = math.exp %11 : vector<8x32xf32>
    %13 = math.log1p %12 : vector<8x32xf32>
    %14 = arith.addf %8, %13 : vector<8x32xf32>
    %cst_7 = arith.constant 9.99999974E-5 : f32
    %15 = vector.broadcast %cst_7 : f32 to vector<8x32xf32>
    %16 = arith.addf %14, %15 : vector<8x32xf32>
    %c16_i32 = arith.constant 16 : i32
    %17 = vector.broadcast %c16_i32 : i32 to vector<8x32xi32>
    %18 = arith.cmpi slt, %6, %17 : vector<8x32xi32>
    %19 = arith.select %18, %5, %16 : vector<8x32xi1>, vector<8x32xf32>
    %c0_8 = arith.constant 0 : index
    %c0_9 = arith.constant 0 : index
    %20 = vector.load %arg4[%c0_8, %c0_9] : memref<8x32xf32, #tpu.memory_space<vmem>>, vector<8x32xf32>
    tpu.vector_store %arg4[%c0_8, %c0_9], %19 {strides = array<i32>} : memref<8x32xf32, #tpu.memory_space<vmem>>, vector<8x32xf32>,
    return
  }
  func.func @transform_0(%arg0: i32) -> (i32, i32) {
    %c0_i32 = arith.constant 0 : i32
    %c0_i32_0 = arith.constant 0 : i32
    return %arg0, %c0_i32 : i32, i32
  }
  func.func @transform_1(%arg0: i32) -> (i32, i32) {
    %c0_i32 = arith.constant 0 : i32
    %c0_i32_0 = arith.constant 0 : i32
    %c0_i32_1 = arith.constant 0 : i32
    return %c0_i32, %c0_i32_0 : i32, i32
  }
  func.func @transform_2(%arg0: i32) -> (i32, i32) {
    %c0_i32 = arith.constant 0 : i32
    %c0_i32_0 = arith.constant 0 : i32
    %c0_i32_1 = arith.constant 0 : i32
    return %c0_i32, %c0_i32_0 : i32, i32
  }
  func.func @transform_3(%arg0: i32) -> (i32, i32) {
    %c0_i32 = arith.constant 0 : i32
    %c0_i32_0 = arith.constant 0 : i32
    return %arg0, %c0_i32 : i32, i32
  }
}

</mosaic_0001>

<llo_original>
// kernel: gauss_head.1
$region0: #{gauss_head.1}
  #allocation0 [shape = 'u32[]', space=smem, size = 0x4, offset = 0x4, fixed_abs, tag = 'smem constant byte address 0x4 - core index']
  #allocation1 [shape = 'u32[144,128]{1,0:T(1,128)}', space=vmem, size = 0x12000, scoped, tag = 'internal scratch']
  %s0 = inlined_call_operand.hbm [shape: f32[16,32], index: 0, kind: input, shape index: {}]
  %s1 = inlined_call_operand.hbm [shape: f32[32,32], index: 1, kind: input, shape index: {}]
  %s2 = inlined_call_operand.vmem [shape: f32[1,32], index: 2, kind: input, shape index: {}]
  %s3 = inlined_call_operand.vmem [shape: f32[16,32], index: 3, kind: output, shape index: {}]
  %s4 = sld [smem:[#allocation0]]
  $region53: #{gauss_head.1} parent=0
    _
  %s6 = ssub.s32 1, %s4
  %s7 = scalar_select 0, %s6, %s4
  $region1: #{gauss_head.1} parent=0
    #allocation2 [shape = 'u8[8192]{0}', space=vmem, size = 0x2000, scoped, tag = 'input window, operand 0']
    #allocation3 [shape = 's32[2]{0}', space=sflag, size = 0x8, scoped, tag = 'scoped memory for gauss_head.1']
    #allocation4 [shape = 'u8[16384]{0}', space=vmem, size = 0x4000, scoped, tag = 'input window, operand 1, single buffered']
    #allocation5 [shape = 's32[1]{0}', space=sflag, size = 0x4, scoped, tag = 'scoped memory for gauss_head.1']
    %8 = vsyncpa [#allocation3], 0
    %s9 = scalar_lea.sflag [#allocation3], 1
    %10 = vsyncpa %s9, 0
    %11 = vsyncpa [#allocation5], 0
    loop: start=0, step=1, limit=4
    $region2: #{gauss_head.1} parent=1 // loop_pre_header
      _
    $region3: #{gauss_head.1} parent=1 // loop_header
      %s13 = sphi 0, %s17
      %p14 = scmp.ge.s32.totalorder %s13, 4
      %s23 = sphi 0, %s25
      %s26 = sphi 0, %s23
      %s27 = sphi 0, %s26
      %s43 = sphi 0, %s27
      %s47 = sphi 0, %s47
      %s49 = sphi 0, %s47
      %s50 = sphi 0, %s49
      %s64 = sphi 0, %s50
      %s68 = sphi 0, %s68
      %s70 = sphi 0, %s68
      %s71 = sphi 0, %s70
      %s85 = sphi 0, %s71
      %s91 = sphi 0, %s93
      %s94 = sphi 0, %s91
      %s95 = sphi 0, %s94
      %s111 = sphi 0, %s95
    $region4: #{gauss_head.1} parent=1 // loop_header_branch
      %16 = sbr.rel (%p14) target = $region8
    $region5: #{gauss_head.1} parent=1 // loop_body
      %s18 = ssub.s32 %s13, 1
      %s19 = ssub.s32 %s13, 2
      %s20 = sadd.s32 %s13, 1
      %s21 = ssub.s32 %s13, %s20
      %p22 = scmp.eq.s32.totalorder %s21, 0
      %s24 = sadd.s32 %s23, 1
      %s25 = scalar_select %p22, %s23, %s24
      %p28 = pneg %p22
      %p29 = scmp.eq.s32.totalorder %s13, 1
      %p30 = por %p28, %p29
      %p31 = scmp.ne.s32.totalorder %s23, %s26
      %p32 = scmp.eq.s32.totalorder %s13, 0
      %p33 = por %p31, %p32
      %p34 = scmp.ne.s32.totalorder %s23, %s26
      %p35 = scmp.eq.s32.totalorder %s18, 1
      %p36 = por %p34, %p35
      %p37 = scmp.ne.s32.totalorder %s26, %s27
      %p38 = scmp.eq.s32.totalorder %s18, 0
      %p39 = por %p37, %p38
      %p40 = scmp.ne.s32.totalorder %s26, %s27
      %p41 = scmp.eq.s32.totalorder %s19, 1
      %p42 = por %p40, %p41
      %p44 = scmp.ne.s32.totalorder %s27, %s43
      %p45 = scmp.eq.s32.totalorder %s19, 0
      %p46 = por %p44, %p45
      %s48 = sadd.s32 %s47, 1
      %p51 = scmp.eq.s32.totalorder %s13, 1
      %p52 = scmp.ne.s32.totalorder %s47, %s49
      %p53 = scmp.eq.s32.totalorder %s13, 0
      %p54 = por %p52, %p53
      %p55 = scmp.ne.s32.totalorder %s47, %s49
      %p56 = scmp.eq.s32.totalorder %s18, 1
      %p57 = por %p55, %p56
      %p58 = scmp.ne.s32.totalorder %s49, %s50
      %p59 = scmp.eq.s32.totalorder %s18, 0
      %p60 = por %p58, %p59
      %p61 = scmp.ne.s32.totalorder %s49, %s50
      %p62 = scmp.eq.s32.totalorder %s19, 1
      %p63 = por %p61, %p62
      %p65 = scmp.ne.s32.totalorder %s50, %s64
      %p66 = scmp.eq.s32.totalorder %s19, 0
      %p67 = por %p65, %p66
      %s69 = sadd.s32 %s68, 1
      %p72 = scmp.eq.s32.totalorder %s13, 1
      %p73 = scmp.ne.s32.totalorder %s68, %s70
      %p74 = scmp.eq.s32.totalorder %s13, 0
      %p75 = por %p73, %p74
      %p76 = scmp.ne.s32.totalorder %s68, %s70
      %p77 = scmp.eq.s32.totalorder %s18, 1
      %p78 = por %p76, %p77
      %p79 = scmp.ne.s32.totalorder %s70, %s71
      %p80 = scmp.eq.s32.totalorder %s18, 0
      %p81 = por %p79, %p80
      %p82 = scmp.ne.s32.totalorder %s70, %s71
      %p83 = scmp.eq.s32.totalorder %s19, 1
      %p84 = por %p82, %p83
      %p86 = scmp.ne.s32.totalorder %s71, %s85
      %p87 = scmp.eq.s32.totalorder %s19, 0
      %p88 = por %p86, %p87
      %s89 = ssub.s32 %s13, %s20
      %p90 = scmp.eq.s32.totalorder %s89, 0
      %s92 = sadd.s32 %s91, 1
      %s93 = scalar_select %p90, %s91, %s92
      %p96 = pneg %p90
      %p97 = scmp.eq.s32.totalorder %s13, 1
      %p98 = por %p96, %p97
      %p99 = scmp.ne.s32.totalorder %s91, %s94
      %p100 = scmp.eq.s32.totalorder %s13, 0
      %p101 = por %p99, %p100
      %p102 = scmp.ne.s32.totalorder %s91, %s94
      %p103 = scmp.eq.s32.totalorder %s18, 1
      %p104 = por %p102, %p103
      %p105 = scmp.ne.s32.totalorder %s94, %s95
      %p106 = scmp.eq.s32.totalorder %s18, 0
      %p107 = por %p105, %p106
      %p108 = scmp.ne.s32.totalorder %s94, %s95
      %p109 = scmp.eq.s32.totalorder %s19, 1
      %p110 = por %p108, %p109
      %p112 = scmp.ne.s32.totalorder %s95, %s111
      %p113 = scmp.eq.s32.totalorder %s19, 0
      %p114 = por %p112, %p113
      %p115 = scmp.le.s32.totalorder 1, %s13
      %p116 = scmp.lt.s32.totalorder %s13, 3
      %p117 = pnand %p115, %p116
      %p118 = pneg %p117
      // Predicated region
      $region9: #{gauss_head.1} parent=5 // pred_check
        _
      $region10: #{gauss_head.1} parent=5 // pred_check_branch
        %120 = sbr.rel (%p117) target = $region12
      $region11: #{gauss_head.1} parent=5 // pred_region
        %s121 = ssub.s32 %s13, 1
        // Predicated region
        $region13: #{gauss_head.1} parent=11 // pred_check
          %p122 = pneg %p60
        $region14: #{gauss_head.1} parent=11 // pred_check_branch
          %124 = sbr.rel (%p122) target = $region16
        $region15: #{gauss_head.1} parent=11 // pred_region
          %s126 = ssub.s32 512, 512
          %127 = vsyncadd [#allocation5], %s126
          %s128 = sshll.u32 [#allocation4], 4
          %s129 = int_to_ptr.vmem [resolvable:$true] %s128
          %134 = dma.hbm_to_vmem [thread:$0]  %s1, 512, %s129, [#allocation5], 128, 128, 8
        $region16: #{gauss_head.1} parent=11 // pred_fallthru
          _
        // Predicated region
        $region17: #{gauss_head.1} parent=11 // pred_check
          %p135 = pneg %p81
        $region18: #{gauss_head.1} parent=11 // pred_check_branch
          %137 = sbr.rel (%p135) target = $region20
        $region19: #{gauss_head.1} parent=11 // pred_region
          _
        $region20: #{gauss_head.1} parent=11 // pred_fallthru
          _
      $region12: #{gauss_head.1} parent=5 // pred_fallthru
        _
      %p138 = scmp.lt.s32.totalorder %s13, 2
      // Predicated region
      $region21: #{gauss_head.1} parent=5 // pred_check
        %p139 = pneg %p138
      $region22: #{gauss_head.1} parent=5 // pred_check_branch
        %141 = sbr.rel (%p139) target = $region24
      $region23: #{gauss_head.1} parent=5 // pred_region
        // Predicated region
        $region25: #{gauss_head.1} parent=23 // pred_check
          %p142 = pneg %p33
        $region26: #{gauss_head.1} parent=23 // pred_check_branch
          %144 = sbr.rel (%p142) target = $region28
        $region27: #{gauss_head.1} parent=23 // pred_region
          %s145 = sand.u32 %s23, 1
          %s146 = scalar_lea.sflag [#allocation3], %s145
          %s147 = sand.u32 %s23, 1
          %s148 = smul.addr %s147, 8
          %s149 = scalar_lea.vmem [#allocation2], %s148
          %s151 = ssub.s32 128, 128
          %152 = vsyncadd %s146, %s151
          %s153 = smul.addr %s13, 128
          %s154 = scalar_lea.hbm %s0, %s153
          %s156 = sshll.u32 %s149, 4
          %s157 = int_to_ptr.vmem [resolvable:$true] %s156
          %159 = dma.hbm_to_vmem [thread:$0]  %s154, 128, %s157, %s146
        $region28: #{gauss_head.1} parent=23 // pred_fallthru
          _
      $region24: #{gauss_head.1} parent=5 // pred_fallthru
        _
      %p160 = scmp.le.s32.totalorder 1, %s13
      %p161 = scmp.lt.s32.totalorder %s13, 3
      %p162 = pnand %p160, %p161
      %p163 = pneg %p162
      // Predicated region
      $region29: #{gauss_head.1} parent=5 // pred_check
        _
      $region30: #{gauss_head.1} parent=5 // pred_check_branch
        %165 = sbr.rel (%p162) target = $region32
      $region31: #{gauss_head.1} parent=5 // pred_region
        %s166 = ssub.s32 %s13, 1
        %s167 = sand.u32 %s26, 1
        %s168 = scalar_lea.sflag [#allocation3], %s167
        %s169 = sand.u32 %s26, 1
        %s170 = smul.addr %s169, 8
        %s171 = scalar_lea.vmem [#allocation2], %s170
        // Predicated region
        $region33: #{gauss_head.1} parent=31 // pred_check
          %p172 = pneg %p39
        $region34: #{gauss_head.1} parent=31 // pred_check_branch
          %174 = sbr.rel (%p172) target = $region36
        $region35: #{gauss_head.1} parent=31 // pred_region
          %175 = dma.done %s168, 128
        $region36: #{gauss_head.1} parent=31 // pred_fallthru
          _
        // Predicated region
        $region37: #{gauss_head.1} parent=31 // pred_check
          %p176 = pneg %p60
        $region38: #{gauss_head.1} parent=31 // pred_check_branch
          %178 = sbr.rel (%p176) target = $region40
        $region39: #{gauss_head.1} parent=31 // pred_region
          %179 = dma.done [#allocation5], 512
        $region40: #{gauss_head.1} parent=31 // pred_fallthru
          _
        %s180 = sand.u32 %s26, 1
        %s181 = scalar_lea.sflag [#allocation3], %s180
        %s182 = sand.u32 %s26, 1
        %s183 = smul.addr %s182, 8
        %s184 = scalar_lea.vmem [#allocation2], %s183
        %p185 = pneg %p39
        %p186 = pneg %p36
        %p187 = pneg %p60
        %p188 = pneg %p57
        %p189 = pneg %p81
        %p190 = pneg %p78
        %p191 = pneg %p107
        %p192 = pneg %p104
        %p193 = scmp.lt.s32.totalorder %s18, 1
        %s194 = scalar_select %p193, %s18, 1
        %s195 = smul.addr %s194, 8
        %s196 = scalar_lea.vmem %s3, %s195
        %p197 = scmp.lt.s32.totalorder %s18, 1
        %s198 = scalar_select %p197, %s18, 1
        %s199 = smul.addr %s198, 8
        %s200 = scalar_lea.vmem %s3, %s199
        %v201 = vld [vmem:[%s171] sm:$0xff]
        %v202 = vld [vmem:[#allocation4] sm:$0xff]
        %v203 = vld [vmem:[#allocation4 + $0x8] sm:$0xff]
        %v204 = vld [vmem:[#allocation4 + $0x10] sm:$0xff]
        %v205 = vld [vmem:[#allocation4 + $0x18] sm:$0xff]
        %v206 = vld [vmem:[%s2] sm:$0x1]
        %v208 = vlaneseq
        %v209 = vshrl.u32 %v208, 7
        %v210 = vsub.s32 0, %v209
        %v211 = vrot.slane %v206, %v210
        %vm213 = vcmask 261120
        %v215 = vsel %vm213, %v201, 0
        %217 = vmatprep.subr.mxu0 0.0
        %218 = vmatpush1.msra.mxu0 0.0
        %219 = vmatprep.subr.mxu0 0.0
        %220 = vmatpush1.msra.mxu0 0.0
        %221 = vmatprep.subr.mxu0 0.0
        %222 = vmatpush1.msra.mxu0 0.0
        %223 = vmatprep.subr.mxu0 0.0
        %224 = vmatpush1.msra.mxu0 0.0
        %225 = vmatprep.subr.mxu0 0.0
        %226 = vmatpush1.msra.mxu0 0.0
        %227 = vmatprep.subr.mxu0 0.0
        %228 = vmatpush1.msra.mxu0 0.0
        %229 = vmatprep.subr.mxu0 0.0
        %230 = vmatpush1.msra.mxu0 0.0
        %231 = vmatprep.subr.mxu0 0.0
        %232 = vmatpush1.msra.mxu0 0.0
        %233 = vmatprep.subr.mxu0 0.0
        %234 = vmatpush1.msra.mxu0 0.0
        %235 = vmatprep.subr.mxu0 0.0
        %236 = vmatpush1.msra.mxu0 0.0
        %237 = vmatprep.subr.mxu0 0.0
        %238 = vmatpush1.msra.mxu0 0.0
        %239 = vmatprep.subr.mxu0 0.0
        %240 = vmatpush1.msra.mxu0 0.0
        %241 = vmatprep.subr.mxu0 0.0
        %242 = vmatpush1.msra.mxu0 %v205
        %243 = vmatprep.subr.mxu0 0.0
        %244 = vmatpush1.msra.mxu0 %v204
        %245 = vmatprep.subr.mxu0 0.0
        %246 = vmatpush1.msra.mxu0 %v203
        %247 = vmatprep.subr.mxu0 0.0
        %248 = vmatpush1.msra.mxu0 %v202
        %249 = vmatprep.subr.mxu0 0.0
        %250 = vmatpush2.msra.mxu0 0.0
        %251 = vmatprep.subr.mxu0 0.0
        %252 = vmatpush2.msra.mxu0 0.0
        %253 = vmatprep.subr.mxu0 0.0
        %254 = vmatpush2.msra.mxu0 0.0
        %255 = vmatprep.subr.mxu0 0.0
        %256 = vmatpush2.msra.mxu0 0.0
        %257 = vmatprep.subr.mxu0 0.0
        %258 = vmatpush2.msra.mxu0 0.0
        %259 = vmatprep.subr.mxu0 0.0
        %260 = vmatpush2.msra.mxu0 0.0
        %261 = vmatprep.subr.mxu0 0.0
        %262 = vmatpush2.msra.mxu0 0.0
        %263 = vmatprep.subr.mxu0 0.0
        %264 = vmatpush2.msra.mxu0 0.0
        %265 = vmatprep.subr.mxu0 0.0
        %266 = vmatpush2.msra.mxu0 0.0
        %267 = vmatprep.subr.mxu0 0.0
        %268 = vmatpush2.msra.mxu0 0.0
        %269 = vmatprep.subr.mxu0 0.0
        %270 = vmatpush2.msra.mxu0 0.0
        %271 = vmatprep.subr.mxu0 0.0
        %272 = vmatpush2.msra.mxu0 0.0
        %273 = vmatprep.subr.mxu0 0.0
        %274 = vmatpush2.msra.mxu0 0.0
        %275 = vmatprep.subr.mxu0 0.0
        %276 = vmatpush2.msra.mxu0 0.0
        %277 = vmatprep.subr.mxu0 0.0
        %278 = vmatpush2.msra.mxu0 0.0
        %279 = vmatprep.subr.mxu0 0.0
        %280 = vmatpush2.msra.mxu0 0.0
        %281 = vmatprep.mubr.f32.mxu0 0.0
        %282 = vmatmul.mubr.f32.gmra.mxu0 %v215
        %v283 = vpop.f32.mrf.mxu0
        %v284 = vadd.f32 %v211, %v283
        %v285 = vpop.f32.mrf.mxu0
        %286 = vdwg.mxu0
        %v287 = vlaneseq
        %v288 = vand.u32 %v287, 127
        %v289 = vmax.f32 %v284, 0.0
        %v290 = vand.u32 2147483647, %v284
        %v291 = vsub.f32 0.0, %v290
        %v292 = vmul.f32 %v291, 1.442695
        %v293 = vpow.pop %v292
        %v294 = vadd.f32 %v293, 1.0
        %v295 = vlog2.pop %v294
        %v296 = vmul.f32 %v295, 0.6931472
        %v297 = vmul.f32 -0.5, %v293
        %v298 = vadd.f32 %v297, 1.0
        %v299 = vmul.f32 %v298, %v293
        %v300 = vand.u32 2147483647, %v293
        %vm301 = vcmp.lt.f32.partialorder %v300, 0.0004427343
        %v302 = vsel %vm301, %v299, %v296
        %v303 = vadd.f32 %v289, %v302
        %v304 = vadd.f32 %v303, 0.0001
        %vm305 = vcmp.lt.s32.totalorder %v288, 16
        %v306 = vsel %vm305, %v284, %v304
        %307 = vst.msk [vmem:[%s200] sm:$0xff] %vm213, %v306
        %p308 = scmp.lt.s32.totalorder %s18, 1
        %s309 = scalar_select %p308, %s18, 1
        %s310 = smul.addr %s309, 8
        %s311 = scalar_lea.vmem %s3, %s310
        // Predicated region
        $region41: #{gauss_head.1} parent=31 // pred_check
          %p312 = pneg %p104
        $region42: #{gauss_head.1} parent=31 // pred_check_branch
          %314 = sbr.rel (%p312) target = $region44
        $region43: #{gauss_head.1} parent=31 // pred_region
          _
        $region44: #{gauss_head.1} parent=31 // pred_fallthru
          _
      $region32: #{gauss_head.1} parent=5 // pred_fallthru
        _
      %p315 = scmp.le.s32.totalorder 2, %s13
      // Predicated region
      $region45: #{gauss_head.1} parent=5 // pred_check
        %p316 = pneg %p315
      $region46: #{gauss_head.1} parent=5 // pred_check_branch
        %318 = sbr.rel (%p316) target = $region48
      $region47: #{gauss_head.1} parent=5 // pred_region
        %s319 = ssub.s32 %s13, 2
        // Predicated region
        $region49: #{gauss_head.1} parent=47 // pred_check
          %p320 = pneg %p110
        $region50: #{gauss_head.1} parent=47 // pred_check_branch
          %322 = sbr.rel (%p320) target = $region52
        $region51: #{gauss_head.1} parent=47 // pred_region
          %p323 = scmp.lt.s32.totalorder %s19, 1
          %s324 = scalar_select %p323, %s19, 1
          %s325 = smul.addr %s324, 8
          %s326 = scalar_lea.vmem %s3, %s325
        $region52: #{gauss_head.1} parent=47 // pred_fallthru
          _
      $region48: #{gauss_head.1} parent=5 // pred_fallthru
        _
    $region6: #{gauss_head.1} parent=1 // loop_footer
      %s17 = sadd.s32 1, %s13
    $region7: #{gauss_head.1} parent=1 // loop_footer_branch
      %12 = sbr.rel target = $region3
    $region8: #{gauss_head.1} parent=1 // loop_exit
      _
    %327 = vsyncpa [#allocation3], 1
    %s328 = scalar_lea.sflag [#allocation3], 1
    %329 = vsyncpa %s328, 1
    %330 = vsyncpa [#allocation5], 1

</llo_original>
